<compile_context>
chip_gen: v6e
topology: v6e:2x2x1
jax: 0.10.0
libtpu: 0.0.40
codegen_flags: <defaults>
</compile_context>

<pallas_src>
import jax
import jax.numpy as jnp
from jax.experimental import pallas as pl
from jax.experimental.pallas import tpu as pltpu

# ----------------------------- problem sizes -------------------------------
B = 2          # batch
T = 16         # max_len (sequence length)
H = 32         # encoder_hidden == spk_emb_dim == hidden_dim of prosodic net
CIN_PAD = 8    # pros_rep has 2 channels; padded to 8 with zero weights
BT = B * T
EPS_IN = 1e-5      # InstanceNorm1d eps
EPS_NRM = 1e-12    # F.normalize eps

# packed-weight row offsets (all multiples of 8 -> sublane-aligned slices)
OFF_W1 = 0                        # (CIN_PAD, H) conv1 k=1 weight
OFF_WPA = OFF_W1 + CIN_PAD        # (H, H) projection weight, "x" half
OFF_WPB = OFF_WPA + H             # (H, H) projection weight, "spk" half
OFF_W2 = OFF_WPB + H              # (3H, H) conv2 taps stacked along K
OFF_W3 = OFF_W2 + 3 * H           # (3H, H) conv3 taps stacked along K
W_ROWS = OFF_W3 + 3 * H           # 264


# ------------------------------- kernel ------------------------------------
def variance_adaptor_kernel(
    len_ref,   # SMEM (B,) int32   valid lengths (scalar prefetch)
    x_ref,     # (B, T, H)         encoder output
    pros_ref,  # (B, T, CIN_PAD)   prosodic features (zero-padded channels)
    spk_ref,   # (B, H)            raw speaker embeddings
    w_ref,     # (W_ROWS, H)       packed [w1; wpa; wpb; w2_stacked; w3_stacked]
    b_ref,     # (3, H)            packed [b2; b3; bp]
    out_ref,   # (B, T, H)
):
    # Flatten batch into the matmul M dimension.
    x = x_ref[...].reshape(BT, H)
    pros = pros_ref[...].reshape(BT, CIN_PAD)
    spk = spk_ref[...]                               # (B, H)

    # Static (aligned) slices of the packed parameters.
    w1 = w_ref[OFF_W1:OFF_W1 + CIN_PAD, :]           # (8, H)
    wpa = w_ref[OFF_WPA:OFF_WPA + H, :]              # (H, H)
    wpb = w_ref[OFF_WPB:OFF_WPB + H, :]              # (H, H)
    w2s = w_ref[OFF_W2:OFF_W2 + 3 * H, :]            # (3H, H)
    w3s = w_ref[OFF_W3:OFF_W3 + 3 * H, :]            # (3H, H)
    b2 = b_ref[0:1, :]
    b3 = b_ref[1:2, :]
    bp = b_ref[2:3, :]

    def leaky(v):
        return jnp.where(v > 0, v, 0.1 * v)

    def inorm(v):  # (BT, H): InstanceNorm1d over time, per sample & channel
        v3 = v.reshape(B, T, H)
        mu = jnp.mean(v3, axis=1, keepdims=True)
        d = v3 - mu
        var = jnp.mean(d * d, axis=1, keepdims=True)
        return (d * jax.lax.rsqrt(var + EPS_IN)).reshape(BT, H)

    # Per-flat-row structural predicates, computed once and reused by both
    # conv layers and by the final length mask.
    row = jax.lax.broadcasted_iota(jnp.int32, (BT, 1), 0)
    is_first = row == 0                              # t == 0 within a sample
    is_last = row == T - 1                           # t == T-1 within a sample
    for bb in range(1, B):
        is_first = jnp.logical_or(is_first, row == bb * T)
        is_last = jnp.logical_or(is_last, row == bb * T + T - 1)

    def conv3(v, w_stacked, bias):
        # y[t] = v[t-1]@W0 + v[t]@W1 + v[t+1]@W2 + b (zero pad per sample),
        # fused into a single (BT, 3H) @ (3H, H) matmul.
        prev = jnp.where(is_first, 0.0, jnp.roll(v, 1, axis=0))
        nxt = jnp.where(is_last, 0.0, jnp.roll(v, -1, axis=0))
        stacked = jnp.concatenate([prev, v, nxt], axis=-1)     # (BT, 3H)
        return jnp.dot(stacked, w_stacked,
                       preferred_element_type=jnp.float32) + bias

    # --- ContinuousProsodicNet ---
    h = inorm(leaky(jnp.dot(pros, w1, preferred_element_type=jnp.float32)))
    h = inorm(leaky(conv3(h, w2s, b2)))
    h = inorm(leaky(conv3(h, w3s, b3)))

    # --- x + prosodic reps ---
    xh = x + h

    # --- F.normalize(spk_emb); fold speaker projection with the bias ---
    sq = jnp.sum(spk * spk, axis=1, keepdims=True)             # (B, 1)
    spk_n = spk / jnp.maximum(jnp.sqrt(sq), EPS_NRM)           # (B, H)
    sb = jnp.dot(spk_n, wpb, preferred_element_type=jnp.float32) + bp  # (B, H)
    sb_flat = jnp.broadcast_to(sb[:, None, :], (B, T, H)).reshape(BT, H)

    # --- reduce_projection + in-kernel masked_fill(mask, 0) ---
    proj = jnp.dot(xh, wpa, preferred_element_type=jnp.float32) + sb_flat

    # cutoff[row] = (sample base) + length[sample]; keep rows with row < cutoff
    cutoff = jnp.broadcast_to(len_ref[0], (BT, 1))
    for bb in range(1, B):
        cutoff = jnp.where(row >= bb * T, bb * T + len_ref[bb], cutoff)
    y = jnp.where(row < cutoff, proj, 0.0)

    out_ref[...] = y.reshape(B, T, H)


# ------------------------------ wrapper -------------------------------------
def variance_adaptor(x, pros_pad, spk, lengths, w_pack, b_pack):
    grid_spec = pltpu.PrefetchScalarGridSpec(
        num_scalar_prefetch=1,           # `lengths` -> SMEM
        grid=(1,),                       # single step: whole problem at once
        in_specs=[
            pl.BlockSpec((B, T, H), lambda i, lens: (0, 0, 0)),        # x
            pl.BlockSpec((B, T, CIN_PAD), lambda i, lens: (0, 0, 0)),  # pros
            pl.BlockSpec((B, H), lambda i, lens: (0, 0)),              # spk
            pl.BlockSpec((W_ROWS, H), lambda i, lens: (0, 0)),         # weights
            pl.BlockSpec((3, H), lambda i, lens: (0, 0)),              # biases
        ],
        out_specs=pl.BlockSpec((B, T, H), lambda i, lens: (0, 0, 0)),
    )
    return pl.pallas_call(
        variance_adaptor_kernel,
        out_shape=jax.ShapeDtypeStruct((B, T, H), jnp.float32),
        grid_spec=grid_spec,
        compiler_params=pltpu.CompilerParams(
            dimension_semantics=("arbitrary",)),
    )(lengths, x, pros_pad, spk, w_pack, b_pack)


# ------------------------- pure-JAX reference --------------------------------
def reference(x, pros_pad, spk, mask_bool, params):
    w1, w2, b2, w3, b3, wpa, wpb, bp = params

    def leaky(v):
        return jnp.where(v > 0, v, 0.1 * v)

    def inorm(v):  # (B, T, H): normalize over T
        mu = v.mean(axis=1, keepdims=True)
        var = ((v - mu) ** 2).mean(axis=1, keepdims=True)
        return (v - mu) * jax.lax.rsqrt(var + EPS_IN)

    def conv3(v, w, b):
        vp = jnp.pad(v, ((0, 0), (1, 1), (0, 0)))
        return (vp[:, 0:T] @ w[0] + vp[:, 1:T + 1] @ w[1]
                + vp[:, 2:T + 2] @ w[2] + b)

    h = inorm(leaky(pros_pad @ w1))
    h = inorm(leaky(conv3(h, w2, b2)))
    h = inorm(leaky(conv3(h, w3, b3)))
    xh = x + h

    spk_n = spk / jnp.maximum(
        jnp.sqrt(jnp.sum(spk * spk, axis=1, keepdims=True)), EPS_NRM)
    y = xh @ wpa + (spk_n @ wpb)[:, None, :] + bp
    return jnp.where(mask_bool[..., None], 0.0, y)


# --------------------------------- main --------------------------------------
if __name__ == "__main__":
    key = jax.random.PRNGKey(0)
    ks = jax.random.split(key, 12)

    # --- deterministic parameters (synthetic init, torch shapes noted) ---
    # Conv1d(2, H, k=1, bias=False): torch weight (H, 2, 1) -> matmul (2, H),
    # zero-padded to (CIN_PAD, H) so the padded input channels contribute 0.
    w1_real = 0.3 * jax.random.normal(ks[0], (2, H), jnp.float32)
    w1 = jnp.zeros((CIN_PAD, H), jnp.float32).at[:2].set(w1_real)
    # Conv1d(H, H, k=3): torch weight (H, H, 3) -> (3, Cin, Cout)
    w2 = 0.1 * jax.random.normal(ks[1], (3, H, H), jnp.float32)
    b2 = 0.1 * jax.random.normal(ks[2], (1, H), jnp.float32)
    w3 = 0.1 * jax.random.normal(ks[3], (3, H, H), jnp.float32)
    b3 = 0.1 * jax.random.normal(ks[4], (1, H), jnp.float32)
    # Linear(2H, H): torch weight (H, 2H) -> split into two (H, H) matmuls.
    wpa = 0.1 * jax.random.normal(ks[5], (H, H), jnp.float32)
    wpb = 0.1 * jax.random.normal(ks[6], (H, H), jnp.float32)
    bp = 0.1 * jax.random.normal(ks[7], (1, H), jnp.float32)
    params = (w1, w2, b2, w3, b3, wpa, wpb, bp)

    # Packed operands for the kernel (conv weights stacked along K).
    w_pack = jnp.concatenate(
        [w1, wpa, wpb, w2.reshape(3 * H, H), w3.reshape(3 * H, H)], axis=0)
    b_pack = jnp.concatenate([b2, b3, bp], axis=0)
    assert w_pack.shape == (W_ROWS, H)

    # --- inputs ---
    x = jax.random.normal(ks[8], (B, T, H), jnp.float32)
    pros_rep = jax.random.normal(ks[9], (B, T, 2), jnp.float32)
    pros_pad = jnp.zeros((B, T, CIN_PAD), jnp.float32).at[:, :, :2].set(pros_rep)
    spk_emb = jax.random.normal(ks[10], (B, 1, H), jnp.float32)
    spk = spk_emb[:, 0, :]                                   # squeeze(1)
    lengths = jnp.array([T, T - 5], jnp.int32)
    mask_bool = jnp.arange(T)[None, :] >= lengths[:, None]   # (B, T) True=pad

    out = variance_adaptor(x, pros_pad, spk, lengths, w_pack, b_pack)
    out = jax.block_until_ready(out)

    ref = reference(x, pros_pad, spk, mask_bool, params)
    assert out.shape == (B, T, H)
    assert jnp.allclose(out, ref, atol=1e-4, rtol=1e-4), (
        float(jnp.max(jnp.abs(out - ref))))

    print("KERNEL_OK")
</pallas_src>

<mosaic_0001>
module attributes {stable_mosaic.version = 11 : i64} {
  func.func @variance_adaptor_kernel(%arg0: i32, %arg1: memref<2xi32, #tpu.memory_space<smem>>, %arg2: memref<2x16x32xf32, #tpu.memory_space<vmem>>, %arg3: memref<2x16x8xf32, #tpu.memory_space<vmem>>, %arg4: memref<2x32xf32, #tpu.memory_space<vmem>>, %arg5: memref<264x32xf32, #tpu.memory_space<vmem>>, %arg6: memref<3x32xf32, #tpu.memory_space<vmem>>, %arg7: memref<2x16x32xf32, #tpu.memory_space<vmem>>) attributes {dimension_semantics = [#tpu.dimension_semantics<arbitrary>], iteration_bounds = array<i64: 1>, scalar_prefetch = 1 : i64, scratch_operands = 0 : i64, tpu.core_type = #tpu.core_type<tc>, window_params = [{pipeline_mode = #tpu.pipeline_mode<synchronous>, transform_indices = @transform_0, window_bounds = array<i64: 2, 16, 32>}, {pipeline_mode = #tpu.pipeline_mode<synchronous>, transform_indices = @transform_1, window_bounds = array<i64: 2, 16, 8>}, {pipeline_mode = #tpu.pipeline_mode<synchronous>, transform_indices = @transform_2, window_bounds = array<i64: 2, 32>}, {pipeline_mode = #tpu.pipeline_mode<synchronous>, transform_indices = @transform_3, window_bounds = array<i64: 264, 32>}, {pipeline_mode = #tpu.pipeline_mode<synchronous>, transform_indices = @transform_4, window_bounds = array<i64: 3, 32>}, {pipeline_mode = #tpu.pipeline_mode<synchronous>, transform_indices = @transform_5, window_bounds = array<i64: 2, 16, 32>}]} {
    %c0 = arith.constant 0 : index
    %c0_0 = arith.constant 0 : index
    %c0_1 = arith.constant 0 : index
    %0 = vector.load %arg2[%c0, %c0_0, %c0_1] : memref<2x16x32xf32, #tpu.memory_space<vmem>>, vector<2x16x32xf32>
    %1 = vector.shape_cast %0 : vector<2x16x32xf32> to vector<32x32xf32>
    %c0_2 = arith.constant 0 : index
    %c0_3 = arith.constant 0 : index
    %c0_4 = arith.constant 0 : index
    %2 = vector.load %arg3[%c0_2, %c0_3, %c0_4] : memref<2x16x8xf32, #tpu.memory_space<vmem>>, vector<2x16x8xf32>
    %3 = vector.shape_cast %2 : vector<2x16x8xf32> to vector<32x8xf32>
    %c0_5 = arith.constant 0 : index
    %c0_6 = arith.constant 0 : index
    %4 = vector.load %arg4[%c0_5, %c0_6] : memref<2x32xf32, #tpu.memory_space<vmem>>, vector<2x32xf32>
    %c0_7 = arith.constant 0 : index
    %c0_8 = arith.constant 0 : index
    %5 = vector.load %arg5[%c0_7, %c0_8] : memref<264x32xf32, #tpu.memory_space<vmem>>, vector<8x32xf32>
    %c8 = arith.constant 8 : index
    %c0_9 = arith.constant 0 : index
    %6 = vector.load %arg5[%c8, %c0_9] : memref<264x32xf32, #tpu.memory_space<vmem>>, vector<32x32xf32>
    %c40 = arith.constant 40 : index
    %c0_10 = arith.constant 0 : index
    %7 = vector.load %arg5[%c40, %c0_10] : memref<264x32xf32, #tpu.memory_space<vmem>>, vector<32x32xf32>
    %c72 = arith.constant 72 : index
    %c0_11 = arith.constant 0 : index
    %8 = vector.load %arg5[%c72, %c0_11] : memref<264x32xf32, #tpu.memory_space<vmem>>, vector<96x32xf32>
    %c168 = arith.constant 168 : index
    %c0_12 = arith.constant 0 : index
    %9 = vector.load %arg5[%c168, %c0_12] : memref<264x32xf32, #tpu.memory_space<vmem>>, vector<96x32xf32>
    %c0_13 = arith.constant 0 : index
    %c0_14 = arith.constant 0 : index
    %10 = vector.load %arg6[%c0_13, %c0_14] : memref<3x32xf32, #tpu.memory_space<vmem>>, vector<1x32xf32>
    %c1 = arith.constant 1 : index
    %c0_15 = arith.constant 0 : index
    %11 = vector.load %arg6[%c1, %c0_15] : memref<3x32xf32, #tpu.memory_space<vmem>>, vector<1x32xf32>
    %c2 = arith.constant 2 : index
    %c0_16 = arith.constant 0 : index
    %12 = vector.load %arg6[%c2, %c0_16] : memref<3x32xf32, #tpu.memory_space<vmem>>, vector<1x32xf32>
    %13 = tpu.iota {dimensions = array<i32: 0>} : vector<32x1xi32>
    %c0_i32 = arith.constant 0 : i32
    %14 = vector.broadcast %c0_i32 : i32 to vector<32x1xi32>
    %15 = arith.cmpi eq, %13, %14 : vector<32x1xi32>
    %c15_i32 = arith.constant 15 : i32
    %16 = vector.broadcast %c15_i32 : i32 to vector<32x1xi32>
    %17 = arith.cmpi eq, %13, %16 : vector<32x1xi32>
    %c16_i32 = arith.constant 16 : i32
    %18 = vector.broadcast %c16_i32 : i32 to vector<32x1xi32>
    %19 = arith.cmpi eq, %13, %18 : vector<32x1xi32>
    %20 = arith.ori %15, %19 : vector<32x1xi1>
    %c31_i32 = arith.constant 31 : i32
    %21 = vector.broadcast %c31_i32 : i32 to vector<32x1xi32>
    %22 = arith.cmpi eq, %13, %21 : vector<32x1xi32>
    %23 = arith.ori %17, %22 : vector<32x1xi1>
    %cst = arith.constant dense<0.000000e+00> : vector<32x32xf32>
    %24 = tpu.matmul %3, %5, %cst {dimension_numbers = #tpu.dot_dimension_numbers<[1], [0], [0], [1], [0, 0, 1, 1], [], []>} : vector<32x8xf32>, vector<8x32xf32>, vector<32x32xf32> -> vector<32x32xf32>
    %cst_17 = arith.constant 0.000000e+00 : f32
    %25 = vector.broadcast %cst_17 : f32 to vector<32x32xf32>
    %26 = arith.cmpf ogt, %24, %25 : vector<32x32xf32>
    %cst_18 = arith.constant 1.000000e-01 : f32
    %27 = vector.broadcast %cst_18 : f32 to vector<32x32xf32>
    %28 = arith.mulf %27, %24 : vector<32x32xf32>
    %29 = arith.select %26, %24, %28 : vector<32x32xi1>, vector<32x32xf32>
    %30 = vector.shape_cast %29 : vector<32x32xf32> to vector<2x16x32xf32>
    %cst_19 = arith.constant dense<0.000000e+00> : vector<2x32xf32>
    %31 = vector.multi_reduction <add>, %30, %cst_19 [1] : vector<2x16x32xf32> to vector<2x32xf32>
    %32 = vector.shape_cast %31 : vector<2x32xf32> to vector<2x1x32xf32>
    %cst_20 = arith.constant 1.600000e+01 : f32
    %33 = vector.broadcast %cst_20 : f32 to vector<2x1x32xf32>
    %34 = arith.divf %32, %33 : vector<2x1x32xf32>
    %35 = vector.broadcast %34 : vector<2x1x32xf32> to vector<2x16x32xf32>
    %36 = arith.subf %30, %35 : vector<2x16x32xf32>
    %37 = arith.mulf %36, %36 : vector<2x16x32xf32>
    %cst_21 = arith.constant dense<0.000000e+00> : vector<2x32xf32>
    %38 = vector.multi_reduction <add>, %37, %cst_21 [1] : vector<2x16x32xf32> to vector<2x32xf32>
    %39 = vector.shape_cast %38 : vector<2x32xf32> to vector<2x1x32xf32>
    %cst_22 = arith.constant 1.600000e+01 : f32
    %40 = vector.broadcast %cst_22 : f32 to vector<2x1x32xf32>
    %41 = arith.divf %39, %40 : vector<2x1x32xf32>
    %cst_23 = arith.constant 9.99999974E-6 : f32
    %42 = vector.broadcast %cst_23 : f32 to vector<2x1x32xf32>
    %43 = arith.addf %41, %42 : vector<2x1x32xf32>
    %44 = math.rsqrt %43 : vector<2x1x32xf32>
    %45 = vector.broadcast %44 : vector<2x1x32xf32> to vector<2x16x32xf32>
    %46 = arith.mulf %36, %45 : vector<2x16x32xf32>
    %47 = vector.shape_cast %46 : vector<2x16x32xf32> to vector<32x32xf32>
    %48 = vector.extract_strided_slice %47 {offsets = [31, 0], sizes = [1, 32], strides = [1, 1]} : vector<32x32xf32> to vector<1x32xf32>
    %49 = vector.extract_strided_slice %47 {offsets = [0, 0], sizes = [31, 32], strides = [1, 1]} : vector<32x32xf32> to vector<31x32xf32>
    %50 = tpu.concatenate %48, %49 in 0 : vector<1x32xf32>, vector<31x32xf32> -> vector<32x32xf32>
    %cst_24 = arith.constant 0.000000e+00 : f32
    %51 = vector.shape_cast %20 : vector<32x1xi1> to vector<32x1xi1>
    %52 = vector.broadcast %51 : vector<32x1xi1> to vector<32x32xi1>
    %53 = vector.broadcast %cst_24 : f32 to vector<32x32xf32>
    %54 = arith.select %52, %53, %50 : vector<32x32xi1>, vector<32x32xf32>
    %55 = vector.extract_strided_slice %47 {offsets = [1, 0], sizes = [31, 32], strides = [1, 1]} : vector<32x32xf32> to vector<31x32xf32>
    %56 = vector.extract_strided_slice %47 {offsets = [0, 0], sizes = [1, 32], strides = [1, 1]} : vector<32x32xf32> to vector<1x32xf32>
    %57 = tpu.concatenate %55, %56 in 0 : vector<31x32xf32>, vector<1x32xf32> -> vector<32x32xf32>
    %cst_25 = arith.constant 0.000000e+00 : f32
    %58 = vector.shape_cast %23 : vector<32x1xi1> to vector<32x1xi1>
    %59 = vector.broadcast %58 : vector<32x1xi1> to vector<32x32xi1>
    %60 = vector.broadcast %cst_25 : f32 to vector<32x32xf32>
    %61 = arith.select %59, %60, %57 : vector<32x32xi1>, vector<32x32xf32>
    %62 = tpu.concatenate %54, %47, %61 in 1 : vector<32x32xf32>, vector<32x32xf32>, vector<32x32xf32> -> vector<32x96xf32>
    %cst_26 = arith.constant dense<0.000000e+00> : vector<32x32xf32>
    %63 = tpu.matmul %62, %8, %cst_26 {dimension_numbers = #tpu.dot_dimension_numbers<[1], [0], [0], [1], [0, 0, 1, 1], [], []>} : vector<32x96xf32>, vector<96x32xf32>, vector<32x32xf32> -> vector<32x32xf32>
    %64 = vector.broadcast %10 : vector<1x32xf32> to vector<32x32xf32>
    %65 = arith.addf %63, %64 : vector<32x32xf32>
    %cst_27 = arith.constant 0.000000e+00 : f32
    %66 = vector.broadcast %cst_27 : f32 to vector<32x32xf32>
    %67 = arith.cmpf ogt, %65, %66 : vector<32x32xf32>
    %cst_28 = arith.constant 1.000000e-01 : f32
    %68 = vector.broadcast %cst_28 : f32 to vector<32x32xf32>
    %69 = arith.mulf %68, %65 : vector<32x32xf32>
    %70 = arith.select %67, %65, %69 : vector<32x32xi1>, vector<32x32xf32>
    %71 = vector.shape_cast %70 : vector<32x32xf32> to vector<2x16x32xf32>
    %cst_29 = arith.constant dense<0.000000e+00> : vector<2x32xf32>
    %72 = vector.multi_reduction <add>, %71, %cst_29 [1] : vector<2x16x32xf32> to vector<2x32xf32>
    %73 = vector.shape_cast %72 : vector<2x32xf32> to vector<2x1x32xf32>
    %cst_30 = arith.constant 1.600000e+01 : f32
    %74 = vector.broadcast %cst_30 : f32 to vector<2x1x32xf32>
    %75 = arith.divf %73, %74 : vector<2x1x32xf32>
    %76 = vector.broadcast %75 : vector<2x1x32xf32> to vector<2x16x32xf32>
    %77 = arith.subf %71, %76 : vector<2x16x32xf32>
    %78 = arith.mulf %77, %77 : vector<2x16x32xf32>
    %cst_31 = arith.constant dense<0.000000e+00> : vector<2x32xf32>
    %79 = vector.multi_reduction <add>, %78, %cst_31 [1] : vector<2x16x32xf32> to vector<2x32xf32>
    %80 = vector.shape_cast %79 : vector<2x32xf32> to vector<2x1x32xf32>
    %cst_32 = arith.constant 1.600000e+01 : f32
    %81 = vector.broadcast %cst_32 : f32 to vector<2x1x32xf32>
    %82 = arith.divf %80, %81 : vector<2x1x32xf32>
    %cst_33 = arith.constant 9.99999974E-6 : f32
    %83 = vector.broadcast %cst_33 : f32 to vector<2x1x32xf32>
    %84 = arith.addf %82, %83 : vector<2x1x32xf32>
    %85 = math.rsqrt %84 : vector<2x1x32xf32>
    %86 = vector.broadcast %85 : vector<2x1x32xf32> to vector<2x16x32xf32>
    %87 = arith.mulf %77, %86 : vector<2x16x32xf32>
    %88 = vector.shape_cast %87 : vector<2x16x32xf32> to vector<32x32xf32>
    %89 = vector.extract_strided_slice %88 {offsets = [31, 0], sizes = [1, 32], strides = [1, 1]} : vector<32x32xf32> to vector<1x32xf32>
    %90 = vector.extract_strided_slice %88 {offsets = [0, 0], sizes = [31, 32], strides = [1, 1]} : vector<32x32xf32> to vector<31x32xf32>
    %91 = tpu.concatenate %89, %90 in 0 : vector<1x32xf32>, vector<31x32xf32> -> vector<32x32xf32>
    %cst_34 = arith.constant 0.000000e+00 : f32
    %92 = vector.shape_cast %20 : vector<32x1xi1> to vector<32x1xi1>
    %93 = vector.broadcast %92 : vector<32x1xi1> to vector<32x32xi1>
    %94 = vector.broadcast %cst_34 : f32 to vector<32x32xf32>
    %95 = arith.select %93, %94, %91 : vector<32x32xi1>, vector<32x32xf32>
    %96 = vector.extract_strided_slice %88 {offsets = [1, 0], sizes = [31, 32], strides = [1, 1]} : vector<32x32xf32> to vector<31x32xf32>
    %97 = vector.extract_strided_slice %88 {offsets = [0, 0], sizes = [1, 32], strides = [1, 1]} : vector<32x32xf32> to vector<1x32xf32>
    %98 = tpu.concatenate %96, %97 in 0 : vector<31x32xf32>, vector<1x32xf32> -> vector<32x32xf32>
    %cst_35 = arith.constant 0.000000e+00 : f32
    %99 = vector.shape_cast %23 : vector<32x1xi1> to vector<32x1xi1>
    %100 = vector.broadcast %99 : vector<32x1xi1> to vector<32x32xi1>
    %101 = vector.broadcast %cst_35 : f32 to vector<32x32xf32>
    %102 = arith.select %100, %101, %98 : vector<32x32xi1>, vector<32x32xf32>
    %103 = tpu.concatenate %95, %88, %102 in 1 : vector<32x32xf32>, vector<32x32xf32>, vector<32x32xf32> -> vector<32x96xf32>
    %cst_36 = arith.constant dense<0.000000e+00> : vector<32x32xf32>
    %104 = tpu.matmul %103, %9, %cst_36 {dimension_numbers = #tpu.dot_dimension_numbers<[1], [0], [0], [1], [0, 0, 1, 1], [], []>} : vector<32x96xf32>, vector<96x32xf32>, vector<32x32xf32> -> vector<32x32xf32>
    %105 = vector.broadcast %11 : vector<1x32xf32> to vector<32x32xf32>
    %106 = arith.addf %104, %105 : vector<32x32xf32>
    %cst_37 = arith.constant 0.000000e+00 : f32
    %107 = vector.broadcast %cst_37 : f32 to vector<32x32xf32>
    %108 = arith.cmpf ogt, %106, %107 : vector<32x32xf32>
    %cst_38 = arith.constant 1.000000e-01 : f32
    %109 = vector.broadcast %cst_38 : f32 to vector<32x32xf32>
    %110 = arith.mulf %109, %106 : vector<32x32xf32>
    %111 = arith.select %108, %106, %110 : vector<32x32xi1>, vector<32x32xf32>
    %112 = vector.shape_cast %111 : vector<32x32xf32> to vector<2x16x32xf32>
    %cst_39 = arith.constant dense<0.000000e+00> : vector<2x32xf32>
    %113 = vector.multi_reduction <add>, %112, %cst_39 [1] : vector<2x16x32xf32> to vector<2x32xf32>
    %114 = vector.shape_cast %113 : vector<2x32xf32> to vector<2x1x32xf32>
    %cst_40 = arith.constant 1.600000e+01 : f32
    %115 = vector.broadcast %cst_40 : f32 to vector<2x1x32xf32>
    %116 = arith.divf %114, %115 : vector<2x1x32xf32>
    %117 = vector.broadcast %116 : vector<2x1x32xf32> to vector<2x16x32xf32>
    %118 = arith.subf %112, %117 : vector<2x16x32xf32>
    %119 = arith.mulf %118, %118 : vector<2x16x32xf32>
    %cst_41 = arith.constant dense<0.000000e+00> : vector<2x32xf32>
    %120 = vector.multi_reduction <add>, %119, %cst_41 [1] : vector<2x16x32xf32> to vector<2x32xf32>
    %121 = vector.shape_cast %120 : vector<2x32xf32> to vector<2x1x32xf32>
    %cst_42 = arith.constant 1.600000e+01 : f32
    %122 = vector.broadcast %cst_42 : f32 to vector<2x1x32xf32>
    %123 = arith.divf %121, %122 : vector<2x1x32xf32>
    %cst_43 = arith.constant 9.99999974E-6 : f32
    %124 = vector.broadcast %cst_43 : f32 to vector<2x1x32xf32>
    %125 = arith.addf %123, %124 : vector<2x1x32xf32>
    %126 = math.rsqrt %125 : vector<2x1x32xf32>
    %127 = vector.broadcast %126 : vector<2x1x32xf32> to vector<2x16x32xf32>
    %128 = arith.mulf %118, %127 : vector<2x16x32xf32>
    %129 = vector.shape_cast %128 : vector<2x16x32xf32> to vector<32x32xf32>
    %130 = arith.addf %1, %129 : vector<32x32xf32>
    %131 = arith.mulf %4, %4 : vector<2x32xf32>
    %cst_44 = arith.constant dense<0.000000e+00> : vector<2xf32>
    %132 = vector.multi_reduction <add>, %131, %cst_44 [1] : vector<2x32xf32> to vector<2xf32>
    %133 = vector.shape_cast %132 : vector<2xf32> to vector<2x1xf32>
    %134 = math.sqrt %133 : vector<2x1xf32>
    %cst_45 = arith.constant 9.99999996E-13 : f32
    %135 = vector.broadcast %cst_45 : f32 to vector<2x1xf32>
    %136 = arith.maximumf %134, %135 : vector<2x1xf32>
    %137 = vector.broadcast %136 : vector<2x1xf32> to vector<2x32xf32>
    %138 = arith.divf %4, %137 : vector<2x32xf32>
    %cst_46 = arith.constant dense<0.000000e+00> : vector<2x32xf32>
    %139 = tpu.matmul %138, %7, %cst_46 {dimension_numbers = #tpu.dot_dimension_numbers<[1], [0], [0], [1], [0, 0, 1, 1], [], []>} : vector<2x32xf32>, vector<32x32xf32>, vector<2x32xf32> -> vector<2x32xf32>
    %140 = vector.broadcast %12 : vector<1x32xf32> to vector<2x32xf32>
    %141 = arith.addf %139, %140 : vector<2x32xf32>
    %142 = vector.shape_cast %141 : vector<2x32xf32> to vector<2x1x32xf32>
    %143 = vector.shape_cast %142 : vector<2x1x32xf32> to vector<2x1x32xf32>
    %144 = vector.broadcast %143 : vector<2x1x32xf32> to vector<2x16x32xf32>
    %145 = vector.shape_cast %144 : vector<2x16x32xf32> to vector<32x32xf32>
    %cst_47 = arith.constant dense<0.000000e+00> : vector<32x32xf32>
    %146 = tpu.matmul %130, %6, %cst_47 {dimension_numbers = #tpu.dot_dimension_numbers<[1], [0], [0], [1], [0, 0, 1, 1], [], []>} : vector<32x32xf32>, vector<32x32xf32>, vector<32x32xf32> -> vector<32x32xf32>
    %147 = arith.addf %146, %145 : vector<32x32xf32>
    %c0_48 = arith.constant 0 : index
    %148 = memref.load %arg1[%c0_48] : memref<2xi32, #tpu.memory_space<smem>>
    %149 = vector.broadcast %148 : i32 to vector<32x1xi32>
    %c16_i32_49 = arith.constant 16 : i32
    %150 = vector.broadcast %c16_i32_49 : i32 to vector<32x1xi32>
    %151 = arith.cmpi sge, %13, %150 : vector<32x1xi32>
    %c1_50 = arith.constant 1 : index
    %152 = memref.load %arg1[%c1_50] : memref<2xi32, #tpu.memory_space<smem>>
    %c16_i32_51 = arith.constant 16 : i32
    %153 = arith.addi %c16_i32_51, %152 : i32
    %154 = vector.broadcast %153 : i32 to vector<32x1xi32>
    %155 = arith.select %151, %154, %149 : vector<32x1xi1>, vector<32x1xi32>
    %156 = arith.cmpi slt, %13, %155 : vector<32x1xi32>
    %cst_52 = arith.constant 0.000000e+00 : f32
    %157 = vector.shape_cast %156 : vector<32x1xi1> to vector<32x1xi1>
    %158 = vector.broadcast %157 : vector<32x1xi1> to vector<32x32xi1>
    %159 = vector.broadcast %cst_52 : f32 to vector<32x32xf32>
    %160 = arith.select %158, %147, %159 : vector<32x32xi1>, vector<32x32xf32>
    %161 = vector.shape_cast %160 : vector<32x32xf32> to vector<2x16x32xf32>
    %c0_53 = arith.constant 0 : index
    %c0_54 = arith.constant 0 : index
    %c0_55 = arith.constant 0 : index
    %162 = vector.load %arg7[%c0_53, %c0_54, %c0_55] : memref<2x16x32xf32, #tpu.memory_space<vmem>>, vector<2x16x32xf32>
    tpu.vector_store %arg7[%c0_53, %c0_54, %c0_55], %161 {strides = array<i32>} : memref<2x16x32xf32, #tpu.memory_space<vmem>>, vector<2x16x32xf32>,
    return
  }
  func.func @transform_0(%arg0: i32, %arg1: memref<2xi32, #tpu.memory_space<smem>>) -> (i32, i32, i32) {
    %c0_i32 = arith.constant 0 : i32
    %c0_i32_0 = arith.constant 0 : i32
    %c0_i32_1 = arith.constant 0 : i32
    %c0_i32_2 = arith.constant 0 : i32
    return %c0_i32, %c0_i32_0, %c0_i32_1 : i32, i32, i32
  }
  func.func @transform_1(%arg0: i32, %arg1: memref<2xi32, #tpu.memory_space<smem>>) -> (i32, i32, i32) {
    %c0_i32 = arith.constant 0 : i32
    %c0_i32_0 = arith.constant 0 : i32
    %c0_i32_1 = arith.constant 0 : i32
    %c0_i32_2 = arith.constant 0 : i32
    return %c0_i32, %c0_i32_0, %c0_i32_1 : i32, i32, i32
  }
  func.func @transform_2(%arg0: i32, %arg1: memref<2xi32, #tpu.memory_space<smem>>) -> (i32, i32) {
    %c0_i32 = arith.constant 0 : i32
    %c0_i32_0 = arith.constant 0 : i32
    %c0_i32_1 = arith.constant 0 : i32
    return %c0_i32, %c0_i32_0 : i32, i32
  }
  func.func @transform_3(%arg0: i32, %arg1: memref<2xi32, #tpu.memory_space<smem>>) -> (i32, i32) {
    %c0_i32 = arith.constant 0 : i32
    %c0_i32_0 = arith.constant 0 : i32
    %c0_i32_1 = arith.constant 0 : i32
    return %c0_i32, %c0_i32_0 : i32, i32
  }
  func.func @transform_4(%arg0: i32, %arg1: memref<2xi32, #tpu.memory_space<smem>>) -> (i32, i32) {
    %c0_i32 = arith.constant 0 : i32
    %c0_i32_0 = arith.constant 0 : i32
    %c0_i32_1 = arith.constant 0 : i32
    return %c0_i32, %c0_i32_0 : i32, i32
  }
  func.func @transform_5(%arg0: i32, %arg1: memref<2xi32, #tpu.memory_space<smem>>) -> (i32, i32, i32) {
    %c0_i32 = arith.constant 0 : i32
    %c0_i32_0 = arith.constant 0 : i32
    %c0_i32_1 = arith.constant 0 : i32
    %c0_i32_2 = arith.constant 0 : i32
    return %c0_i32, %c0_i32_0, %c0_i32_1 : i32, i32, i32
  }
}

</mosaic_0001>

<llo_original>
// kernel: tpu_custom_call.1
$region0: #{tpu_custom_call.1}
  #allocation0 [shape = 'u32[]', space=smem, size = 0x4, offset = 0x4, fixed_abs, tag = 'smem constant byte address 0x4 - core index']
  #allocation1 [shape = 'u32[144,128]{1,0:T(1,128)}', space=vmem, size = 0x12000, scoped, tag = 'internal scratch']
  #allocation2 [shape = 's32[1]{0}', space=sflag, size = 0x4, scoped, tag = 'scoped memory for tpu_custom_call.1']
  #allocation3 [shape = 'u8[512]{0}', space=smem, size = 0x200, scoped, tag = 'prefetched SMEM operand 0']
  %s0 = inlined_call_operand.vmem [shape: s32[2], index: 0, kind: input, shape index: {}]
  %s1 = inlined_call_operand.vmem [shape: f32[2,16,32], index: 1, kind: input, shape index: {}]
  %s2 = inlined_call_operand.vmem [shape: f32[2,16,8], index: 2, kind: input, shape index: {}]
  %s3 = inlined_call_operand.vmem [shape: f32[2,32], index: 3, kind: input, shape index: {}]
  %s4 = inlined_call_operand.vmem [shape: f32[264,32], index: 4, kind: input, shape index: {}]
  %s5 = inlined_call_operand.vmem [shape: f32[3,32], index: 5, kind: input, shape index: {}]
  %s6 = inlined_call_operand.hbm [shape: f32[2,16,32], index: 6, kind: output, shape index: {}]
  %s7 = sld [smem:[#allocation0]]
  $region30: #{tpu_custom_call.1} parent=0
    _
  %s9 = ssub.s32 1, %s7
  %s10 = scalar_select 0, %s9, %s7
  %s11 = sshll.u32 %s0, 4
  %s12 = int_to_ptr.vmem [resolvable:$true] %s11
  %14 = dma.vmem_to_smem %s12, 16, [#allocation3], [#allocation2]
  %15 = dma.done [#allocation2], 16
  %16 = sfence
  $region1: #{tpu_custom_call.1} parent=0
    #allocation4 [shape = 'u8[16384]{0}', space=vmem, size = 0x4000, scoped, tag = 'output window, operand 0, single buffered']
    #allocation5 [shape = 's32[1]{0}', space=sflag, size = 0x4, scoped, tag = 'scoped memory for tpu_custom_call.1']
    %17 = vsyncpa [#allocation5], 0
    // Predicated region
    $region2: #{tpu_custom_call.1} parent=1 // pred_check
      _
    $region3: #{tpu_custom_call.1} parent=1 // pred_check_branch
      %19 = sbr.rel (0) target = $region5
    $region4: #{tpu_custom_call.1} parent=1 // pred_region
      _
    $region5: #{tpu_custom_call.1} parent=1 // pred_fallthru
      _
    // Predicated region
    $region6: #{tpu_custom_call.1} parent=1 // pred_check
      _
    $region7: #{tpu_custom_call.1} parent=1 // pred_check_branch
      %21 = sbr.rel (0) target = $region9
    $region8: #{tpu_custom_call.1} parent=1 // pred_region
      _
    $region9: #{tpu_custom_call.1} parent=1 // pred_fallthru
      _
    // Predicated region
    $region10: #{tpu_custom_call.1} parent=1 // pred_check
      _
    $region11: #{tpu_custom_call.1} parent=1 // pred_check_branch
      %23 = sbr.rel (0) target = $region13
    $region12: #{tpu_custom_call.1} parent=1 // pred_region
      _
    $region13: #{tpu_custom_call.1} parent=1 // pred_fallthru
      _
    // Predicated region
    $region14: #{tpu_custom_call.1} parent=1 // pred_check
      _
    $region15: #{tpu_custom_call.1} parent=1 // pred_check_branch
      %25 = sbr.rel (0) target = $region17
    $region16: #{tpu_custom_call.1} parent=1 // pred_region
      _
    $region17: #{tpu_custom_call.1} parent=1 // pred_fallthru
      _
    // Predicated region
    $region18: #{tpu_custom_call.1} parent=1 // pred_check
      _
    $region19: #{tpu_custom_call.1} parent=1 // pred_check_branch
      %27 = sbr.rel (0) target = $region21
    $region20: #{tpu_custom_call.1} parent=1 // pred_region
      _
    $region21: #{tpu_custom_call.1} parent=1 // pred_fallthru
      _
    %v28 = vld [vmem:[%s1] sm:$0xff]
    %v29 = vld [vmem:[%s1 + $0x8] sm:$0xff]
    %v30 = vld [vmem:[%s1 + $0x10] sm:$0xff]
    %v31 = vld [vmem:[%s1 + $0x18] sm:$0xff]
    %v32 = vld [vmem:[%s2] sm:$0xff]
    %v33 = vld [vmem:[%s2 + $0x8] sm:$0xff]
    %v34 = vld [vmem:[%s2 + $0x10] sm:$0xff]
    %v35 = vld [vmem:[%s2 + $0x18] sm:$0xff]
    %v36 = vld [vmem:[%s3] sm:$0x3]
    %v37 = vld [vmem:[%s4] sm:$0xff]
    %v38 = vld [vmem:[%s4 + $0x8] sm:$0xff]
    %v39 = vld [vmem:[%s4 + $0x10] sm:$0xff]
    %v40 = vld [vmem:[%s4 + $0x18] sm:$0xff]
    %v41 = vld [vmem:[%s4 + $0x20] sm:$0xff]
    %v42 = vld [vmem:[%s4 + $0x28] sm:$0xff]
    %v43 = vld [vmem:[%s4 + $0x30] sm:$0xff]
    %v44 = vld [vmem:[%s4 + $0x38] sm:$0xff]
    %v45 = vld [vmem:[%s4 + $0x40] sm:$0xff]
    %v46 = vld [vmem:[%s4 + $0x48] sm:$0xff]
    %v47 = vld [vmem:[%s4 + $0x50] sm:$0xff]
    %v48 = vld [vmem:[%s4 + $0x58] sm:$0xff]
    %v49 = vld [vmem:[%s4 + $0x60] sm:$0xff]
    %v50 = vld [vmem:[%s4 + $0x68] sm:$0xff]
    %v51 = vld [vmem:[%s4 + $0x70] sm:$0xff]
    %v52 = vld [vmem:[%s4 + $0x78] sm:$0xff]
    %v53 = vld [vmem:[%s4 + $0x80] sm:$0xff]
    %v54 = vld [vmem:[%s4 + $0x88] sm:$0xff]
    %v55 = vld [vmem:[%s4 + $0x90] sm:$0xff]
    %v56 = vld [vmem:[%s4 + $0x98] sm:$0xff]
    %v57 = vld [vmem:[%s4 + $0xa0] sm:$0xff]
    %v58 = vld [vmem:[%s4 + $0xa8] sm:$0xff]
    %v59 = vld [vmem:[%s4 + $0xb0] sm:$0xff]
    %v60 = vld [vmem:[%s4 + $0xb8] sm:$0xff]
    %v61 = vld [vmem:[%s4 + $0xc0] sm:$0xff]
    %v62 = vld [vmem:[%s4 + $0xc8] sm:$0xff]
    %v63 = vld [vmem:[%s4 + $0xd0] sm:$0xff]
    %v64 = vld [vmem:[%s4 + $0xd8] sm:$0xff]
    %v65 = vld [vmem:[%s4 + $0xe0] sm:$0xff]
    %v66 = vld [vmem:[%s4 + $0xe8] sm:$0xff]
    %v67 = vld [vmem:[%s4 + $0xf0] sm:$0xff]
    %v68 = vld [vmem:[%s4 + $0xf8] sm:$0xff]
    %v69 = vld [vmem:[%s4 + $0x100] sm:$0xff]
    %v70 = vld [vmem:[%s5] sm:$0x1]
    %v71 = vld [vmem:[%s5 + $0x1] sm:$0x1]
    %v72 = vld [vmem:[%s5 + $0x2] sm:$0x1]
    %v73 = vlaneseq
    %v74 = vshrl.u32 %v73, 7
    %v75 = vadd.s32 %v74, 8
    %v76 = vadd.s32 %v74, 16
    %v77 = vadd.s32 %v74, 24
    %vm78 = vcmp.eq.s32.totalorder %v74, 0
    %vm79 = vcmp.eq.s32.totalorder %v75, 0
    %vm80 = vcmp.eq.s32.totalorder %v76, 0
    %vm81 = vcmp.eq.s32.totalorder %v77, 0
    %vm82 = vcmp.eq.s32.totalorder %v74, 15
    %vm83 = vcmp.eq.s32.totalorder %v75, 15
    %vm84 = vcmp.eq.s32.totalorder %v76, 15
    %vm85 = vcmp.eq.s32.totalorder %v77, 15
    %vm86 = vcmp.eq.s32.totalorder %v74, 16
    %vm87 = vcmp.eq.s32.totalorder %v75, 16
    %vm88 = vcmp.eq.s32.totalorder %v76, 16
    %vm89 = vcmp.eq.s32.totalorder %v77, 16
    %vm90 = vmor %vm78, %vm86
    %vm91 = vmor %vm79, %vm87
    %vm92 = vmor %vm80, %vm88
    %vm93 = vmor %vm81, %vm89
    %vm94 = vcmp.eq.s32.totalorder %v74, 31
    %vm95 = vcmp.eq.s32.totalorder %v75, 31
    %vm96 = vcmp.eq.s32.totalorder %v76, 31
    %vm97 = vcmp.eq.s32.totalorder %v77, 31
    %vm98 = vmor %vm82, %vm94
    %vm99 = vmor %vm83, %vm95
    %vm100 = vmor %vm84, %vm96
    %vm101 = vmor %vm85, %vm97
    %vm102 = vcmask 64512
    %v104 = vsel %vm102, %v32, 0
    %v107 = vsel %vm102, %v33, 0
    %v110 = vsel %vm102, %v34, 0
    %v113 = vsel %vm102, %v35, 0
    %115 = vmatprep.subr.mxu0 0.0
    %116 = vmatpush1.msra.mxu0 0.0
    %117 = vmatprep.subr.mxu0 0.0
    %118 = vmatpush1.msra.mxu0 0.0
    %119 = vmatprep.subr.mxu0 0.0
    %120 = vmatpush1.msra.mxu0 0.0
    %121 = vmatprep.subr.mxu0 0.0
    %122 = vmatpush1.msra.mxu0 0.0
    %123 = vmatprep.subr.mxu0 0.0
    %124 = vmatpush1.msra.mxu0 0.0
    %125 = vmatprep.subr.mxu0 0.0
    %126 = vmatpush1.msra.mxu0 0.0
    %127 = vmatprep.subr.mxu0 0.0
    %128 = vmatpush1.msra.mxu0 0.0
    %129 = vmatprep.subr.mxu0 0.0
    %130 = vmatpush1.msra.mxu0 0.0
    %131 = vmatprep.subr.mxu0 0.0
    %132 = vmatpush1.msra.mxu0 0.0
    %133 = vmatprep.subr.mxu0 0.0
    %134 = vmatpush1.msra.mxu0 0.0
    %135 = vmatprep.subr.mxu0 0.0
    %136 = vmatpush1.msra.mxu0 0.0
    %137 = vmatprep.subr.mxu0 0.0
    %138 = vmatpush1.msra.mxu0 0.0
    %139 = vmatprep.subr.mxu0 0.0
    %140 = vmatpush1.msra.mxu0 0.0
    %141 = vmatprep.subr.mxu0 0.0
    %142 = vmatpush1.msra.mxu0 0.0
    %143 = vmatprep.subr.mxu0 0.0
    %144 = vmatpush1.msra.mxu0 0.0
    %145 = vmatprep.subr.mxu0 0.0
    %146 = vmatpush1.msra.mxu0 %v37
    %147 = vmatprep.subr.mxu0 0.0
    %148 = vmatpush2.msra.mxu0 0.0
    %149 = vmatprep.subr.mxu0 0.0
    %150 = vmatpush2.msra.mxu0 0.0
    %151 = vmatprep.subr.mxu0 0.0
    %152 = vmatpush2.msra.mxu0 0.0
    %153 = vmatprep.subr.mxu0 0.0
    %154 = vmatpush2.msra.mxu0 0.0
    %155 = vmatprep.subr.mxu0 0.0
    %156 = vmatpush2.msra.mxu0 0.0
    %157 = vmatprep.subr.mxu0 0.0
    %158 = vmatpush2.msra.mxu0 0.0
    %159 = vmatprep.subr.mxu0 0.0
    %160 = vmatpush2.msra.mxu0 0.0
    %161 = vmatprep.subr.mxu0 0.0
    %162 = vmatpush2.msra.mxu0 0.0
    %163 = vmatprep.subr.mxu0 0.0
    %164 = vmatpush2.msra.mxu0 0.0
    %165 = vmatprep.subr.mxu0 0.0
    %166 = vmatpush2.msra.mxu0 0.0
    %167 = vmatprep.subr.mxu0 0.0
    %168 = vmatpush2.msra.mxu0 0.0
    %169 = vmatprep.subr.mxu0 0.0
    %170 = vmatpush2.msra.mxu0 0.0
    %171 = vmatprep.subr.mxu0 0.0
    %172 = vmatpush2.msra.mxu0 0.0
    %173 = vmatprep.subr.mxu0 0.0
    %174 = vmatpush2.msra.mxu0 0.0
    %175 = vmatprep.subr.mxu0 0.0
    %176 = vmatpush2.msra.mxu0 0.0
    %177 = vmatprep.subr.mxu0 0.0
    %178 = vmatpush2.msra.mxu0 0.0
    %179 = vmatprep.mubr.f32.mxu0 0.0
    %180 = vmatmul.mubr.f32.gmra.mxu0 %v104
    %v181 = vpop.f32.mrf.mxu0
    %v182 = vadd.f32 0.0, %v181
    %v183 = vpop.f32.mrf.mxu0
    %184 = vmatprep.mubr.f32.mxu0 0.0
    %185 = vmatmul.mubr.f32.gmra.mxu0 %v107
    %v186 = vpop.f32.mrf.mxu0
    %v187 = vadd.f32 0.0, %v186
    %v188 = vpop.f32.mrf.mxu0
    %189 = vmatprep.mubr.f32.mxu0 0.0
    %190 = vmatmul.mubr.f32.gmra.mxu0 %v110
    %v191 = vpop.f32.mrf.mxu0
    %v192 = vadd.f32 0.0, %v191
    %v193 = vpop.f32.mrf.mxu0
    %194 = vmatprep.mubr.f32.mxu0 0.0
    %195 = vmatmul.mubr.f32.gmra.mxu0 %v113
    %v196 = vpop.f32.mrf.mxu0
    %v197 = vadd.f32 0.0, %v196
    %v198 = vpop.f32.mrf.mxu0
    %199 = vdwg.mxu0
    %vm200 = vcmp.gt.f32.partialorder %v182, 0.0
    %vm201 = vcmp.gt.f32.partialorder %v187, 0.0
    %vm202 = vcmp.gt.f32.partialorder %v192, 0.0
    %vm203 = vcmp.gt.f32.partialorder %v197, 0.0
    %v204 = vmul.f32 %v182, 0.1
    %v205 = vmul.f32 %v187, 0.1
    %v206 = vmul.f32 %v192, 0.1
    %v207 = vmul.f32 %v197, 0.1
    %v208 = vsel %vm200, %v182, %v204
    %v209 = vsel %vm201, %v187, %v205
    %v210 = vsel %vm202, %v192, %v206
    %v211 = vsel %vm203, %v197, %v207
    %vm212 = vcmask 261120
    %v213 = vsel %vm212, %v208, 0.0
    %v214 = vsel %vm212, %v209, 0.0
    %v215 = vadd.f32 %v213, %v214
    %v216 = vrot.slane %v215, 4
    %v217 = vadd.f32 %v215, %v216
    %v218 = vrot.slane %v217, 2
    %v219 = vadd.f32 %v217, %v218
    %v220 = vrot.slane %v219, 1
    %v221 = vadd.f32 %v219, %v220
    %v222 = vsel %vm212, %v210, 0.0
    %v223 = vsel %vm212, %v211, 0.0
    %v224 = vadd.f32 %v222, %v223
    %v225 = vrot.slane %v224, 4
    %v226 = vadd.f32 %v224, %v225
    %v227 = vrot.slane %v226, 2
    %v228 = vadd.f32 %v226, %v227
    %v229 = vrot.slane %v228, 1
    %v230 = vadd.f32 %v228, %v229
    %v231 = vrcp.pop 16.0
    %v232 = vmul.f32 %v221, %v231
    %v233 = vmul.f32 %v230, %v231
    %v234 = vsub.f32 %v208, %v232
    %v235 = vsub.f32 %v209, %v232
    %v236 = vsub.f32 %v210, %v233
    %v237 = vsub.f32 %v211, %v233
    %v238 = vmul.f32 %v234, %v234
    %v239 = vmul.f32 %v235, %v235
    %v240 = vmul.f32 %v236, %v236
    %v241 = vmul.f32 %v237, %v237
    %v242 = vsel %vm212, %v238, 0.0
    %v243 = vsel %vm212, %v239, 0.0
    %v244 = vadd.f32 %v242, %v243
    %v245 = vrot.slane %v244, 4
    %v246 = vadd.f32 %v244, %v245
    %v247 = vrot.slane %v246, 2
    %v248 = vadd.f32 %v246, %v247
    %v249 = vrot.slane %v248, 1
    %v250 = vadd.f32 %v248, %v249
    %v251 = vsel %vm212, %v240, 0.0
    %v252 = vsel %vm212, %v241, 0.0
    %v253 = vadd.f32 %v251, %v252
    %v254 = vrot.slane %v253, 4
    %v255 = vadd.f32 %v253, %v254
    %v256 = vrot.slane %v255, 2
    %v257 = vadd.f32 %v255, %v256
    %v258 = vrot.slane %v257, 1
    %v259 = vadd.f32 %v257, %v258
    %v260 = vmul.f32 %v250, %v231
    %v261 = vmul.f32 %v259, %v231
    %v262 = vadd.f32 %v260, 1e-05
    %v263 = vadd.f32 %v261, 1e-05
    %v264 = vrsqrt.pop %v262
    %v265 = vrsqrt.pop %v263
    %v266 = vmul.f32 %v234, %v264
    %v267 = vmul.f32 %v235, %v264
    %v268 = vmul.f32 %v236, %v265
    %v269 = vmul.f32 %v237, %v265
    %v271 = vrot.slane %v269, 7
    %vm276 = vcmask 1040384
    %v277 = vrot.slane %v266, 7
    %v278 = vrot.slane %v267, 7
    %v279 = vsel %vm276, %v277, %v278
    %v280 = vrot.slane %v268, 7
    %v281 = vsel %vm276, %v278, %v280
    %v282 = vsel %vm276, %v280, %v271
    %v287 = vsel %vm276, %v271, %v277
    %v288 = vsel %vm90, 1, 0
    %v289 = vsel %vm91, 1, 0
    %v290 = vsel %vm92, 1, 0
    %v291 = vsel %vm93, 1, 0
    %vm292 = vcmp.eq.s32.totalorder %v288, 1
    %vm293 = vcmp.eq.s32.totalorder %v289, 1
    %vm294 = vcmp.eq.s32.totalorder %v290, 1
    %vm295 = vcmp.eq.s32.totalorder %v291, 1
    %v296 = vsel %vm292, 0.0, %v287
    %v297 = vsel %vm293, 0.0, %v279
    %v298 = vsel %vm294, 0.0, %v281
    %v299 = vsel %vm295, 0.0, %v282
    %vm300 = vcmask 1046528
    %v301 = vrot.slane %v266, 1
    %v302 = vrot.slane %v267, 1
    %v303 = vsel %vm300, %v301, %v302
    %v304 = vrot.slane %v268, 1
    %v305 = vsel %vm300, %v302, %v304
    %v306 = vrot.slane %v269, 1
    %v307 = vsel %vm300, %v304, %v306
    %v313 = vsel %vm300, %v306, %v301
    %v314 = vsel %vm98, 1, 0
    %v315 = vsel %vm99, 1, 0
    %v316 = vsel %vm100, 1, 0
    %v317 = vsel %vm101, 1, 0
    %vm318 = vcmp.eq.s32.totalorder %v314, 1
    %vm319 = vcmp.eq.s32.totalorder %v315, 1
    %vm320 = vcmp.eq.s32.totalorder %v316, 1
    %vm321 = vcmp.eq.s32.totalorder %v317, 1
    %v322 = vsel %vm318, 0.0, %v303
    %v323 = vsel %vm319, 0.0, %v305
    %v324 = vsel %vm320, 0.0, %v307
    %v325 = vsel %vm321, 0.0, %v313
    %326 = vrot.lane.b32.xlu0 %v266, 32
    %v327 = vpop.permute.xlu0 %326
    %328 = vrot.lane.b32.xlu0 %v267, 32
    %v329 = vpop.permute.xlu0 %328
    %330 = vrot.lane.b32.xlu0 %v268, 32
    %v331 = vpop.permute.xlu0 %330
    %332 = vrot.lane.b32.xlu0 %v269, 32
    %v333 = vpop.permute.xlu0 %332
    %342 = vrot.lane.b32.xlu0 %v322, 64
    %v343 = vpop.permute.xlu0 %342
    %344 = vrot.lane.b32.xlu0 %v323, 64
    %v345 = vpop.permute.xlu0 %344
    %346 = vrot.lane.b32.xlu0 %v324, 64
    %v347 = vpop.permute.xlu0 %346
    %348 = vrot.lane.b32.xlu0 %v325, 64
    %v349 = vpop.permute.xlu0 %348
    %v354 = vsel %vm212, %v296, %v327
    %v355 = vsel %vm212, %v297, %v329
    %v356 = vsel %vm212, %v298, %v331
    %v357 = vsel %vm212, %v299, %v333
    %vm358 = vcmask 523264
    %v359 = vsel %vm358, %v354, %v343
    %v360 = vsel %vm358, %v355, %v345
    %v361 = vsel %vm358, %v356, %v347
    %v362 = vsel %vm358, %v357, %v349
    %v363 = vlaneseq
    %v364 = vshrl.u32 %v363, 7
    %v365 = vsub.s32 0, %v364
    %v366 = vrot.slane %v70, %v365
    %vm367 = vcmask 785408
    %v369 = vsel %vm367, %v359, 0
    %v372 = vsel %vm367, %v360, 0
    %v375 = vsel %vm367, %v361, 0
    %v378 = vsel %vm367, %v362, 0
    %380 = vmatprep.subr.mxu0 0.0
    %381 = vmatpush1.msra.mxu0 0.0
    %382 = vmatprep.subr.mxu0 0.0
    %383 = vmatpush1.msra.mxu0 0.0
    %384 = vmatprep.subr.mxu0 0.0
    %385 = vmatpush1.msra.mxu0 0.0
    %386 = vmatprep.subr.mxu0 0.0
    %387 = vmatpush1.msra.mxu0 0.0
    %388 = vmatprep.subr.mxu0 0.0
    %389 = vmatpush1.msra.mxu0 %v57
    %390 = vmatprep.subr.mxu0 0.0
    %391 = vmatpush1.msra.mxu0 %v56
    %392 = vmatprep.subr.mxu0 0.0
    %393 = vmatpush1.msra.mxu0 %v55
    %394 = vmatprep.subr.mxu0 0.0
    %395 = vmatpush1.msra.mxu0 %v54
    %396 = vmatprep.subr.mxu0 0.0
    %397 = vmatpush1.msra.mxu0 %v53
    %398 = vmatprep.subr.mxu0 0.0
    %399 = vmatpush1.msra.mxu0 %v52
    %400 = vmatprep.subr.mxu0 0.0
    %401 = vmatpush1.msra.mxu0 %v51
    %402 = vmatprep.subr.mxu0 0.0
    %403 = vmatpush1.msra.mxu0 %v50
    %404 = vmatprep.subr.mxu0 0.0
    %405 = vmatpush1.msra.mxu0 %v49
    %406 = vmatprep.subr.mxu0 0.0
    %407 = vmatpush1.msra.mxu0 %v48
    %408 = vmatprep.subr.mxu0 0.0
    %409 = vmatpush1.msra.mxu0 %v47
    %410 = vmatprep.subr.mxu0 0.0
    %411 = vmatpush1.msra.mxu0 %v46
    %412 = vmatprep.subr.mxu0 0.0
    %413 = vmatpush2.msra.mxu0 0.0
    %414 = vmatprep.subr.mxu0 0.0
    %415 = vmatpush2.msra.mxu0 0.0
    %416 = vmatprep.subr.mxu0 0.0
    %417 = vmatpush2.msra.mxu0 0.0
    %418 = vmatprep.subr.mxu0 0.0
    %419 = vmatpush2.msra.mxu0 0.0
    %420 = vmatprep.subr.mxu0 0.0
    %421 = vmatpush2.msra.mxu0 0.0
    %422 = vmatprep.subr.mxu0 0.0
    %423 = vmatpush2.msra.mxu0 0.0
    %424 = vmatprep.subr.mxu0 0.0
    %425 = vmatpush2.msra.mxu0 0.0
    %426 = vmatprep.subr.mxu0 0.0
    %427 = vmatpush2.msra.mxu0 0.0
    %428 = vmatprep.subr.mxu0 0.0
    %429 = vmatpush2.msra.mxu0 0.0
    %430 = vmatprep.subr.mxu0 0.0
    %431 = vmatpush2.msra.mxu0 0.0
    %432 = vmatprep.subr.mxu0 0.0
    %433 = vmatpush2.msra.mxu0 0.0
    %434 = vmatprep.subr.mxu0 0.0
    %435 = vmatpush2.msra.mxu0 0.0
    %436 = vmatprep.subr.mxu0 0.0
    %437 = vmatpush2.msra.mxu0 0.0
    %438 = vmatprep.subr.mxu0 0.0
    %439 = vmatpush2.msra.mxu0 0.0
    %440 = vmatprep.subr.mxu0 0.0
    %441 = vmatpush2.msra.mxu0 0.0
    %442 = vmatprep.subr.mxu0 0.0
    %443 = vmatpush2.msra.mxu0 0.0
    %444 = vmatprep.mubr.f32.mxu0 0.0
    %445 = vmatmul.mubr.f32.gmra.mxu0 %v369
    %v446 = vpop.f32.mrf.mxu0
    %v447 = vadd.f32 %v366, %v446
    %v448 = vpop.f32.mrf.mxu0
    %449 = vmatprep.mubr.f32.mxu0 0.0
    %450 = vmatmul.mubr.f32.gmra.mxu0 %v372
    %v451 = vpop.f32.mrf.mxu0
    %v452 = vadd.f32 %v366, %v451
    %v453 = vpop.f32.mrf.mxu0
    %454 = vmatprep.mubr.f32.mxu0 0.0
    %455 = vmatmul.mubr.f32.gmra.mxu0 %v375
    %v456 = vpop.f32.mrf.mxu0
    %v457 = vadd.f32 %v366, %v456
    %v458 = vpop.f32.mrf.mxu0
    %459 = vmatprep.mubr.f32.mxu0 0.0
    %460 = vmatmul.mubr.f32.gmra.mxu0 %v378
    %v461 = vpop.f32.mrf.mxu0
    %v462 = vadd.f32 %v366, %v461
    %v463 = vpop.f32.mrf.mxu0
    %464 = vdwg.mxu0
    %vm465 = vcmp.gt.f32.partialorder %v447, 0.0
    %vm466 = vcmp.gt.f32.partialorder %v452, 0.0
    %vm467 = vcmp.gt.f32.partialorder %v457, 0.0
    %vm468 = vcmp.gt.f32.partialorder %v462, 0.0
    %v469 = vmul.f32 %v447, 0.1
    %v470 = vmul.f32 %v452, 0.1
    %v471 = vmul.f32 %v457, 0.1
    %v472 = vmul.f32 %v462, 0.1
    %v473 = vsel %vm465, %v447, %v469
    %v474 = vsel %vm466, %v452, %v470
    %v475 = vsel %vm467, %v457, %v471
    %v476 = vsel %vm468, %v462, %v472
    %v477 = vsel %vm212, %v473, 0.0
    %v478 = vsel %vm212, %v474, 0.0
    %v479 = vadd.f32 %v477, %v478
    %v480 = vrot.slane %v479, 4
    %v481 = vadd.f32 %v479, %v480
    %v482 = vrot.slane %v481, 2
    %v483 = vadd.f32 %v481, %v482
    %v484 = vrot.slane %v483, 1
    %v485 = vadd.f32 %v483, %v484
    %v486 = vsel %vm212, %v475, 0.0
    %v487 = vsel %vm212, %v476, 0.0
    %v488 = vadd.f32 %v486, %v487
    %v489 = vrot.slane %v488, 4
    %v490 = vadd.f32 %v488, %v489
    %v491 = vrot.slane %v490, 2
    %v492 = vadd.f32 %v490, %v491
    %v493 = vrot.slane %v492, 1
    %v494 = vadd.f32 %v492, %v493
    %v495 = vmul.f32 %v485, %v231
    %v496 = vmul.f32 %v494, %v231
    %v497 = vsub.f32 %v473, %v495
    %v498 = vsub.f32 %v474, %v495
    %v499 = vsub.f32 %v475, %v496
    %v500 = vsub.f32 %v476, %v496
    %v501 = vmul.f32 %v497, %v497
    %v502 = vmul.f32 %v498, %v498
    %v503 = vmul.f32 %v499, %v499
    %v504 = vmul.f32 %v500, %v500
    %v505 = vsel %vm212, %v501, 0.0
    %v506 = vsel %vm212, %v502, 0.0
    %v507 = vadd.f32 %v505, %v506
    %v508 = vrot.slane %v507, 4
    %v509 = vadd.f32 %v507, %v508
    %v510 = vrot.slane %v509, 2
    %v511 = vadd.f32 %v509, %v510
    %v512 = vrot.slane %v511, 1
    %v513 = vadd.f32 %v511, %v512
    %v514 = vsel %vm212, %v503, 0.0
    %v515 = vsel %vm212, %v504, 0.0
    %v516 = vadd.f32 %v514, %v515
    %v517 = vrot.slane %v516, 4
    %v518 = vadd.f32 %v516, %v517
    %v519 = vrot.slane %v518, 2
    %v520 = vadd.f32 %v518, %v519
    %v521 = vrot.slane %v520, 1
    %v522 = vadd.f32 %v520, %v521
    %v523 = vmul.f32 %v513, %v231
    %v524 = vmul.f32 %v522, %v231
    %v525 = vadd.f32 %v523, 1e-05
    %v526 = vadd.f32 %v524, 1e-05
    %v527 = vrsqrt.pop %v525
    %v528 = vrsqrt.pop %v526
    %v529 = vmul.f32 %v497, %v527
    %v530 = vmul.f32 %v498, %v527
    %v531 = vmul.f32 %v499, %v528
    %v532 = vmul.f32 %v500, %v528
    %v534 = vrot.slane %v532, 7
    %v539 = vrot.slane %v529, 7
    %v540 = vrot.slane %v530, 7
    %v541 = vsel %vm276, %v539, %v540
    %v542 = vrot.slane %v531, 7
    %v543 = vsel %vm276, %v540, %v542
    %v544 = vsel %vm276, %v542, %v534
    %v549 = vsel %vm276, %v534, %v539
    %v550 = vsel %vm292, 0.0, %v549
    %v551 = vsel %vm293, 0.0, %v541
    %v552 = vsel %vm294, 0.0, %v543
    %v553 = vsel %vm295, 0.0, %v544
    %v554 = vrot.slane %v529, 1
    %v555 = vrot.slane %v530, 1
    %v556 = vsel %vm300, %v554, %v555
    %v557 = vrot.slane %v531, 1
    %v558 = vsel %vm300, %v555, %v557
    %v559 = vrot.slane %v532, 1
    %v560 = vsel %vm300, %v557, %v559
    %v566 = vsel %vm300, %v559, %v554
    %v567 = vsel %vm318, 0.0, %v556
    %v568 = vsel %vm319, 0.0, %v558
    %v569 = vsel %vm320, 0.0, %v560
    %v570 = vsel %vm321, 0.0, %v566
    %571 = vrot.lane.b32.xlu0 %v529, 32
    %v572 = vpop.permute.xlu0 %571
    %573 = vrot.lane.b32.xlu0 %v530, 32
    %v574 = vpop.permute.xlu0 %573
    %575 = vrot.lane.b32.xlu0 %v531, 32
    %v576 = vpop.permute.xlu0 %575
    %577 = vrot.lane.b32.xlu0 %v532, 32
    %v578 = vpop.permute.xlu0 %577
    %587 = vrot.lane.b32.xlu0 %v567, 64
    %v588 = vpop.permute.xlu0 %587
    %589 = vrot.lane.b32.xlu0 %v568, 64
    %v590 = vpop.permute.xlu0 %589
    %591 = vrot.lane.b32.xlu0 %v569, 64
    %v592 = vpop.permute.xlu0 %591
    %593 = vrot.lane.b32.xlu0 %v570, 64
    %v594 = vpop.permute.xlu0 %593
    %v599 = vsel %vm212, %v550, %v572
    %v600 = vsel %vm212, %v551, %v574
    %v601 = vsel %vm212, %v552, %v576
    %v602 = vsel %vm212, %v553, %v578
    %v603 = vsel %vm358, %v599, %v588
    %v604 = vsel %vm358, %v600, %v590
    %v605 = vsel %vm358, %v601, %v592
    %v606 = vsel %vm358, %v602, %v594
    %v607 = vlaneseq
    %v608 = vshrl.u32 %v607, 7
    %v609 = vsub.s32 0, %v608
    %v610 = vrot.slane %v71, %v609
    %v612 = vsel %vm367, %v603, 0
    %v615 = vsel %vm367, %v604, 0
    %v618 = vsel %vm367, %v605, 0
    %v621 = vsel %vm367, %v606, 0
    %623 = vmatprep.subr.mxu0 0.0
    %624 = vmatpush1.msra.mxu0 0.0
    %625 = vmatprep.subr.mxu0 0.0
    %626 = vmatpush1.msra.mxu0 0.0
    %627 = vmatprep.subr.mxu0 0.0
    %628 = vmatpush1.msra.mxu0 0.0
    %629 = vmatprep.subr.mxu0 0.0
    %630 = vmatpush1.msra.mxu0 0.0
    %631 = vmatprep.subr.mxu0 0.0
    %632 = vmatpush1.msra.mxu0 %v69
    %633 = vmatprep.subr.mxu0 0.0
    %634 = vmatpush1.msra.mxu0 %v68
    %635 = vmatprep.subr.mxu0 0.0
    %636 = vmatpush1.msra.mxu0 %v67
    %637 = vmatprep.subr.mxu0 0.0
    %638 = vmatpush1.msra.mxu0 %v66
    %639 = vmatprep.subr.mxu0 0.0
    %640 = vmatpush1.msra.mxu0 %v65
    %641 = vmatprep.subr.mxu0 0.0
    %642 = vmatpush1.msra.mxu0 %v64
    %643 = vmatprep.subr.mxu0 0.0
    %644 = vmatpush1.msra.mxu0 %v63
    %645 = vmatprep.subr.mxu0 0.0
    %646 = vmatpush1.msra.mxu0 %v62
    %647 = vmatprep.subr.mxu0 0.0
    %648 = vmatpush1.msra.mxu0 %v61
    %649 = vmatprep.subr.mxu0 0.0
    %650 = vmatpush1.msra.mxu0 %v60
    %651 = vmatprep.subr.mxu0 0.0
    %652 = vmatpush1.msra.mxu0 %v59
    %653 = vmatprep.subr.mxu0 0.0
    %654 = vmatpush1.msra.mxu0 %v58
    %655 = vmatprep.subr.mxu0 0.0
    %656 = vmatpush2.msra.mxu0 0.0
    %657 = vmatprep.subr.mxu0 0.0
    %658 = vmatpush2.msra.mxu0 0.0
    %659 = vmatprep.subr.mxu0 0.0
    %660 = vmatpush2.msra.mxu0 0.0
    %661 = vmatprep.subr.mxu0 0.0
    %662 = vmatpush2.msra.mxu0 0.0
    %663 = vmatprep.subr.mxu0 0.0
    %664 = vmatpush2.msra.mxu0 0.0
    %665 = vmatprep.subr.mxu0 0.0
    %666 = vmatpush2.msra.mxu0 0.0
    %667 = vmatprep.subr.mxu0 0.0
    %668 = vmatpush2.msra.mxu0 0.0
    %669 = vmatprep.subr.mxu0 0.0
    %670 = vmatpush2.msra.mxu0 0.0
    %671 = vmatprep.subr.mxu0 0.0
    %672 = vmatpush2.msra.mxu0 0.0
    %673 = vmatprep.subr.mxu0 0.0
    %674 = vmatpush2.msra.mxu0 0.0
    %675 = vmatprep.subr.mxu0 0.0
    %676 = vmatpush2.msra.mxu0 0.0
    %677 = vmatprep.subr.mxu0 0.0
    %678 = vmatpush2.msra.mxu0 0.0
    %679 = vmatprep.subr.mxu0 0.0
    %680 = vmatpush2.msra.mxu0 0.0
    %681 = vmatprep.subr.mxu0 0.0
    %682 = vmatpush2.msra.mxu0 0.0
    %683 = vmatprep.subr.mxu0 0.0
    %684 = vmatpush2.msra.mxu0 0.0
    %685 = vmatprep.subr.mxu0 0.0
    %686 = vmatpush2.msra.mxu0 0.0
    %687 = vmatprep.mubr.f32.mxu0 0.0
    %688 = vmatmul.mubr.f32.gmra.mxu0 %v612
    %v689 = vpop.f32.mrf.mxu0
    %v690 = vadd.f32 %v610, %v689
    %v691 = vpop.f32.mrf.mxu0
    %692 = vmatprep.mubr.f32.mxu0 0.0
    %693 = vmatmul.mubr.f32.gmra.mxu0 %v615
    %v694 = vpop.f32.mrf.mxu0
    %v695 = vadd.f32 %v610, %v694
    %v696 = vpop.f32.mrf.mxu0
    %697 = vmatprep.mubr.f32.mxu0 0.0
    %698 = vmatmul.mubr.f32.gmra.mxu0 %v618
    %v699 = vpop.f32.mrf.mxu0
    %v700 = vadd.f32 %v610, %v699
    %v701 = vpop.f32.mrf.mxu0
    %702 = vmatprep.mubr.f32.mxu0 0.0
    %703 = vmatmul.mubr.f32.gmra.mxu0 %v621
    %v704 = vpop.f32.mrf.mxu0
    %v705 = vadd.f32 %v610, %v704
    %v706 = vpop.f32.mrf.mxu0
    %707 = vdwg.mxu0
    %vm708 = vcmp.gt.f32.partialorder %v690, 0.0
    %vm709 = vcmp.gt.f32.partialorder %v695, 0.0
    %vm710 = vcmp.gt.f32.partialorder %v700, 0.0
    %vm711 = vcmp.gt.f32.partialorder %v705, 0.0
    %v712 = vmul.f32 %v690, 0.1
    %v713 = vmul.f32 %v695, 0.1
    %v714 = vmul.f32 %v700, 0.1
    %v715 = vmul.f32 %v705, 0.1
    %v716 = vsel %vm708, %v690, %v712
    %v717 = vsel %vm709, %v695, %v713
    %v718 = vsel %vm710, %v700, %v714
    %v719 = vsel %vm711, %v705, %v715
    %v720 = vsel %vm212, %v716, 0.0
    %v721 = vsel %vm212, %v717, 0.0
    %v722 = vadd.f32 %v720, %v721
    %v723 = vrot.slane %v722, 4
    %v724 = vadd.f32 %v722, %v723
    %v725 = vrot.slane %v724, 2
    %v726 = vadd.f32 %v724, %v725
    %v727 = vrot.slane %v726, 1
    %v728 = vadd.f32 %v726, %v727
    %v729 = vsel %vm212, %v718, 0.0
    %v730 = vsel %vm212, %v719, 0.0
    %v731 = vadd.f32 %v729, %v730
    %v732 = vrot.slane %v731, 4
    %v733 = vadd.f32 %v731, %v732
    %v734 = vrot.slane %v733, 2
    %v735 = vadd.f32 %v733, %v734
    %v736 = vrot.slane %v735, 1
    %v737 = vadd.f32 %v735, %v736
    %v738 = vmul.f32 %v728, %v231
    %v739 = vmul.f32 %v737, %v231
    %v740 = vsub.f32 %v716, %v738
    %v741 = vsub.f32 %v717, %v738
    %v742 = vsub.f32 %v718, %v739
    %v743 = vsub.f32 %v719, %v739
    %v744 = vmul.f32 %v740, %v740
    %v745 = vmul.f32 %v741, %v741
    %v746 = vmul.f32 %v742, %v742
    %v747 = vmul.f32 %v743, %v743
    %v748 = vsel %vm212, %v744, 0.0
    %v749 = vsel %vm212, %v745, 0.0
    %v750 = vadd.f32 %v748, %v749
    %v751 = vrot.slane %v750, 4
    %v752 = vadd.f32 %v750, %v751
    %v753 = vrot.slane %v752, 2
    %v754 = vadd.f32 %v752, %v753
    %v755 = vrot.slane %v754, 1
    %v756 = vadd.f32 %v754, %v755
    %v757 = vsel %vm212, %v746, 0.0
    %v758 = vsel %vm212, %v747, 0.0
    %v759 = vadd.f32 %v757, %v758
    %v760 = vrot.slane %v759, 4
    %v761 = vadd.f32 %v759, %v760
    %v762 = vrot.slane %v761, 2
    %v763 = vadd.f32 %v761, %v762
    %v764 = vrot.slane %v763, 1
    %v765 = vadd.f32 %v763, %v764
    %v766 = vmul.f32 %v756, %v231
    %v767 = vmul.f32 %v765, %v231
    %v768 = vadd.f32 %v766, 1e-05
    %v769 = vadd.f32 %v767, 1e-05
    %v770 = vrsqrt.pop %v768
    %v771 = vrsqrt.pop %v769
    %v772 = vmul.f32 %v740, %v770
    %v773 = vmul.f32 %v741, %v770
    %v774 = vmul.f32 %v742, %v771
    %v775 = vmul.f32 %v743, %v771
    %v776 = vadd.f32 %v28, %v772
    %v777 = vadd.f32 %v29, %v773
    %v778 = vadd.f32 %v30, %v774
    %v779 = vadd.f32 %v31, %v775
    %v780 = vmul.f32 %v36, %v36
    %vm781 = vcmask 254976
    %v782 = vsel %vm781, %v780, 0.0
    %783 = vadd.xlane.f32.xlu0 %v782
    %v784 = vpop.xlane.xlu0 %783
    %v785 = vrsqrt.pop %v784
    %v786 = vmul.f32 %v784, %v785
    %vm787 = vcmp.eq.f32.partialorder %v784, inf
    %v788 = vsel %vm787, %v784, %v786
    %vm789 = vcmp.eq.f32.partialorder %v784, 0.0
    %v790 = vand.u32 %v784, 2147483648
    %v791 = vsel %vm789, %v790, %v788
    %v792 = vmax.f32 %v791, 1e-12
    %v793 = vrcp.pop %v792
    %v794 = vmul.f32 %v36, %v793
    %v795 = vlaneseq
    %v796 = vshrl.u32 %v795, 7
    %v797 = vsub.s32 0, %v796
    %v798 = vrot.slane %v72, %v797
    %v800 = vsel %vm212, %v794, 0
    %802 = vmatprep.subr.mxu0 0.0
    %803 = vmatpush1.msra.mxu0 0.0
    %804 = vmatprep.subr.mxu0 0.0
    %805 = vmatpush1.msra.mxu0 0.0
    %806 = vmatprep.subr.mxu0 0.0
    %807 = vmatpush1.msra.mxu0 0.0
    %808 = vmatprep.subr.mxu0 0.0
    %809 = vmatpush1.msra.mxu0 0.0
    %810 = vmatprep.subr.mxu0 0.0
    %811 = vmatpush1.msra.mxu0 0.0
    %812 = vmatprep.subr.mxu0 0.0
    %813 = vmatpush1.msra.mxu0 0.0
    %814 = vmatprep.subr.mxu0 0.0
    %815 = vmatpush1.msra.mxu0 0.0
    %816 = vmatprep.subr.mxu0 0.0
    %817 = vmatpush1.msra.mxu0 0.0
    %818 = vmatprep.subr.mxu0 0.0
    %819 = vmatpush1.msra.mxu0 0.0
    %820 = vmatprep.subr.mxu0 0.0
    %821 = vmatpush1.msra.mxu0 0.0
    %822 = vmatprep.subr.mxu0 0.0
    %823 = vmatpush1.msra.mxu0 0.0
    %824 = vmatprep.subr.mxu0 0.0
    %825 = vmatpush1.msra.mxu0 0.0
    %826 = vmatprep.subr.mxu0 0.0
    %827 = vmatpush1.msra.mxu0 %v45
    %828 = vmatprep.subr.mxu0 0.0
    %829 = vmatpush1.msra.mxu0 %v44
    %830 = vmatprep.subr.mxu0 0.0
    %831 = vmatpush1.msra.mxu0 %v43
    %832 = vmatprep.subr.mxu0 0.0
    %833 = vmatpush1.msra.mxu0 %v42
    %834 = vmatprep.subr.mxu0 0.0
    %835 = vmatpush2.msra.mxu0 0.0
    %836 = vmatprep.subr.mxu0 0.0
    %837 = vmatpush2.msra.mxu0 0.0
    %838 = vmatprep.subr.mxu0 0.0
    %839 = vmatpush2.msra.mxu0 0.0
    %840 = vmatprep.subr.mxu0 0.0
    %841 = vmatpush2.msra.mxu0 0.0
    %842 = vmatprep.subr.mxu0 0.0
    %843 = vmatpush2.msra.mxu0 0.0
    %844 = vmatprep.subr.mxu0 0.0
    %845 = vmatpush2.msra.mxu0 0.0
    %846 = vmatprep.subr.mxu0 0.0
    %847 = vmatpush2.msra.mxu0 0.0
    %848 = vmatprep.subr.mxu0 0.0
    %849 = vmatpush2.msra.mxu0 0.0
    %850 = vmatprep.subr.mxu0 0.0
    %851 = vmatpush2.msra.mxu0 0.0
    %852 = vmatprep.subr.mxu0 0.0
    %853 = vmatpush2.msra.mxu0 0.0
    %854 = vmatprep.subr.mxu0 0.0
    %855 = vmatpush2.msra.mxu0 0.0
    %856 = vmatprep.subr.mxu0 0.0
    %857 = vmatpush2.msra.mxu0 0.0
    %858 = vmatprep.subr.mxu0 0.0
    %859 = vmatpush2.msra.mxu0 0.0
    %860 = vmatprep.subr.mxu0 0.0
    %861 = vmatpush2.msra.mxu0 0.0
    %862 = vmatprep.subr.mxu0 0.0
    %863 = vmatpush2.msra.mxu0 0.0
    %864 = vmatprep.subr.mxu0 0.0
    %865 = vmatpush2.msra.mxu0 0.0
    %866 = vmatprep.mubr.f32.mxu0 0.0
    %867 = vmatmul.mubr.f32.gmra.mxu0 %v800
    %v868 = vpop.f32.mrf.mxu0
    %v869 = vadd.f32 %v798, %v868
    %v870 = vpop.f32.mrf.mxu0
    %871 = vdwg.mxu0
    %v874 = vunpack.c.l.s4 1966171168
    %v875 = vunpack.c.0.s8 %v874
    %v876 = vlaneseq
    %v877 = vshrl.u32 %v876, 7
    %v878 = vsub.s32 %v875, %v877
    %v879 = vrot.slane %v869, %v878
    %v880 = vcombine.high %v879, %v879
    %v882 = vunpack.c.l.s4 1966171168
    %v883 = vunpack.c.0.s8 %v882
    %v884 = vlaneseq
    %v885 = vshrl.u32 %v884, 7
    %v886 = vsub.s32 %v883, %v885
    %v887 = vrot.slane %v879, %v886
    %v889 = vunpack.c.l.s4 1966171168
    %v890 = vunpack.c.0.s8 %v889
    %v891 = vlaneseq
    %v892 = vshrl.u32 %v891, 7
    %v893 = vsub.s32 %v890, %v892
    %v894 = vrot.slane %v880, %v893
    %v895 = vlaneseq
    %v896 = vshrl.u32 %v895, 7
    %v897 = vsub.s32 0, %v896
    %v898 = vrot.slane %v887, %v897
    %v899 = vlaneseq
    %v900 = vshrl.u32 %v899, 7
    %v901 = vsub.s32 0, %v900
    %v902 = vrot.slane %v894, %v901
    %v906 = vsel %vm212, %v776, 0
    %v909 = vsel %vm212, %v777, 0
    %v912 = vsel %vm212, %v778, 0
    %v915 = vsel %vm212, %v779, 0
    %917 = vmatprep.subr.mxu0 0.0
    %918 = vmatpush1.msra.mxu0 0.0
    %919 = vmatprep.subr.mxu0 0.0
    %920 = vmatpush1.msra.mxu0 0.0
    %921 = vmatprep.subr.mxu0 0.0
    %922 = vmatpush1.msra.mxu0 0.0
    %923 = vmatprep.subr.mxu0 0.0
    %924 = vmatpush1.msra.mxu0 0.0
    %925 = vmatprep.subr.mxu0 0.0
    %926 = vmatpush1.msra.mxu0 0.0
    %927 = vmatprep.subr.mxu0 0.0
    %928 = vmatpush1.msra.mxu0 0.0
    %929 = vmatprep.subr.mxu0 0.0
    %930 = vmatpush1.msra.mxu0 0.0
    %931 = vmatprep.subr.mxu0 0.0
    %932 = vmatpush1.msra.mxu0 0.0
    %933 = vmatprep.subr.mxu0 0.0
    %934 = vmatpush1.msra.mxu0 0.0
    %935 = vmatprep.subr.mxu0 0.0
    %936 = vmatpush1.msra.mxu0 0.0
    %937 = vmatprep.subr.mxu0 0.0
    %938 = vmatpush1.msra.mxu0 0.0
    %939 = vmatprep.subr.mxu0 0.0
    %940 = vmatpush1.msra.mxu0 0.0
    %941 = vmatprep.subr.mxu0 0.0
    %942 = vmatpush1.msra.mxu0 %v41
    %943 = vmatprep.subr.mxu0 0.0
    %944 = vmatpush1.msra.mxu0 %v40
    %945 = vmatprep.subr.mxu0 0.0
    %946 = vmatpush1.msra.mxu0 %v39
    %947 = vmatprep.subr.mxu0 0.0
    %948 = vmatpush1.msra.mxu0 %v38
    %949 = vmatprep.subr.mxu0 0.0
    %950 = vmatpush2.msra.mxu0 0.0
    %951 = vmatprep.subr.mxu0 0.0
    %952 = vmatpush2.msra.mxu0 0.0
    %953 = vmatprep.subr.mxu0 0.0
    %954 = vmatpush2.msra.mxu0 0.0
    %955 = vmatprep.subr.mxu0 0.0
    %956 = vmatpush2.msra.mxu0 0.0
    %957 = vmatprep.subr.mxu0 0.0
    %958 = vmatpush2.msra.mxu0 0.0
    %959 = vmatprep.subr.mxu0 0.0
    %960 = vmatpush2.msra.mxu0 0.0
    %961 = vmatprep.subr.mxu0 0.0
    %962 = vmatpush2.msra.mxu0 0.0
    %963 = vmatprep.subr.mxu0 0.0
    %964 = vmatpush2.msra.mxu0 0.0
    %965 = vmatprep.subr.mxu0 0.0
    %966 = vmatpush2.msra.mxu0 0.0
    %967 = vmatprep.subr.mxu0 0.0
    %968 = vmatpush2.msra.mxu0 0.0
    %969 = vmatprep.subr.mxu0 0.0
    %970 = vmatpush2.msra.mxu0 0.0
    %971 = vmatprep.subr.mxu0 0.0
    %972 = vmatpush2.msra.mxu0 0.0
    %973 = vmatprep.subr.mxu0 0.0
    %974 = vmatpush2.msra.mxu0 0.0
    %975 = vmatprep.subr.mxu0 0.0
    %976 = vmatpush2.msra.mxu0 0.0
    %977 = vmatprep.subr.mxu0 0.0
    %978 = vmatpush2.msra.mxu0 0.0
    %979 = vmatprep.subr.mxu0 0.0
    %980 = vmatpush2.msra.mxu0 0.0
    %981 = vmatprep.mubr.f32.mxu0 0.0
    %982 = vmatmul.mubr.f32.gmra.mxu0 %v906
    %v983 = vpop.f32.mrf.mxu0
    %v984 = vadd.f32 %v898, %v983
    %v985 = vpop.f32.mrf.mxu0
    %986 = vmatprep.mubr.f32.mxu0 0.0
    %987 = vmatmul.mubr.f32.gmra.mxu0 %v909
    %v988 = vpop.f32.mrf.mxu0
    %v989 = vadd.f32 %v898, %v988
    %v990 = vpop.f32.mrf.mxu0
    %991 = vmatprep.mubr.f32.mxu0 0.0
    %992 = vmatmul.mubr.f32.gmra.mxu0 %v912
    %v993 = vpop.f32.mrf.mxu0
    %v994 = vadd.f32 %v902, %v993
    %v995 = vpop.f32.mrf.mxu0
    %996 = vmatprep.mubr.f32.mxu0 0.0
    %997 = vmatmul.mubr.f32.gmra.mxu0 %v915
    %v998 = vpop.f32.mrf.mxu0
    %v999 = vadd.f32 %v902, %v998
    %v1000 = vpop.f32.mrf.mxu0
    %1001 = vdwg.mxu0
    %s1002 = sld [smem:[#allocation3]]
    %v1003 = vstv %s1002
    %vm1004 = vcmp.ge.s32.totalorder %v74, 16
    %vm1005 = vcmp.ge.s32.totalorder %v75, 16
    %vm1006 = vcmp.ge.s32.totalorder %v76, 16
    %vm1007 = vcmp.ge.s32.totalorder %v77, 16
    %s1008 = sld [smem:[#allocation3 + $0x1]]
    %s1009 = sadd.s32 %s1008, 16
    %v1010 = vstv %s1009
    %v1011 = vsel %vm1004, %v1010, %v1003
    %v1012 = vsel %vm1005, %v1010, %v1003
    %v1013 = vsel %vm1006, %v1010, %v1003
    %v1014 = vsel %vm1007, %v1010, %v1003
    %vm1015 = vcmp.lt.s32.totalorder %v74, %v1011
    %vm1016 = vcmp.lt.s32.totalorder %v75, %v1012
    %vm1017 = vcmp.lt.s32.totalorder %v76, %v1013
    %vm1018 = vcmp.lt.s32.totalorder %v77, %v1014
    %v1019 = vsel %vm1015, 1, 0
    %v1020 = vsel %vm1016, 1, 0
    %v1021 = vsel %vm1017, 1, 0
    %v1022 = vsel %vm1018, 1, 0
    %vm1023 = vcmp.eq.s32.totalorder %v1019, 1
    %vm1024 = vcmp.eq.s32.totalorder %v1020, 1
    %vm1025 = vcmp.eq.s32.totalorder %v1021, 1
    %vm1026 = vcmp.eq.s32.totalorder %v1022, 1
    %v1027 = vsel %vm1023, %v984, 0.0
    %v1028 = vsel %vm1024, %v989, 0.0
    %v1029 = vsel %vm1025, %v994, 0.0
    %v1030 = vsel %vm1026, %v999, 0.0
    %1031 = vst.msk [vmem:[#allocation4] sm:$0xff] %vm212, %v1027
    %1032 = vst.msk [vmem:[#allocation4 + $0x8] sm:$0xff] %vm212, %v1028
    %1033 = vst.msk [vmem:[#allocation4 + $0x10] sm:$0xff] %vm212, %v1029
    %1034 = vst.msk [vmem:[#allocation4 + $0x18] sm:$0xff] %vm212, %v1030
    // Predicated region
    $region22: #{tpu_custom_call.1} parent=1 // pred_check
      _
    $region23: #{tpu_custom_call.1} parent=1 // pred_check_branch
      %1036 = sbr.rel (0) target = $region25
    $region24: #{tpu_custom_call.1} parent=1 // pred_region
      %s1038 = ssub.s32 512, 512
      %1039 = vsyncadd [#allocation5], %s1038
      %s1040 = sshll.u32 [#allocation4], 4
      %s1041 = int_to_ptr.vmem [resolvable:$true] %s1040
      %1046 = dma.vmem_to_hbm [thread:$0]  %s1041, 512, %s6, [#allocation5], 128, 128, 8
    $region25: #{tpu_custom_call.1} parent=1 // pred_fallthru
      _
    // Predicated region
    $region26: #{tpu_custom_call.1} parent=1 // pred_check
      _
    $region27: #{tpu_custom_call.1} parent=1 // pred_check_branch
      %1048 = sbr.rel (0) target = $region29
    $region28: #{tpu_custom_call.1} parent=1 // pred_region
      %1049 = dma.done [#allocation5], 512
    $region29: #{tpu_custom_call.1} parent=1 // pred_fallthru
      _
    %1050 = vsyncpa [#allocation5], 1

</llo_original>
